<compile_context>
chip_gen: v5e
topology: v5e:2x2
jax: 0.10.0
libtpu: 0.0.40
codegen_flags: <defaults>
</compile_context>

<pallas_src>
import functools

import jax
import jax.numpy as jnp
from jax import lax
from jax.experimental import pallas as pl
from jax.experimental.pallas import tpu as pltpu

_LANES = 128
_SUBLANES = 8
_MAX_BLOCK_ROWS = 8192                 # 8192 x 128 f32 = 4 MiB per input block
_VMEM_LIMIT_BYTES = 48 * 1024 * 1024   # headroom for double-buffered inputs


def _psnr_stats_kernel(test_ref, true_ref, out_ref,
                       sumsq_ref, max_ref, min_ref, *,
                       n_elems, block_rows, blocks_per_core,
                       needs_mask, first_mask_block):
    c = pl.program_id(0)                       # core / partial-stats slot
    i = pl.program_id(1)                       # block within this core
    g = c * blocks_per_core + i                # logical global block index

    @pl.when(i == 0)
    def _init():
        sumsq_ref[...] = jnp.zeros_like(sumsq_ref)
        max_ref[...] = jnp.full_like(max_ref, -jnp.inf)
        min_ref[...] = jnp.full_like(min_ref, jnp.inf)

    n_sub = block_rows // _SUBLANES

    def _accumulate(d, y_mx, y_mn):
        # Cross-vreg (leading-axis) reductions: pure VPU work into one vreg.
        dsq = (d * d).reshape(n_sub, _SUBLANES, _LANES)
        sumsq_ref[...] += jnp.sum(dsq, axis=0)
        max_ref[...] = jnp.maximum(
            max_ref[...],
            jnp.max(y_mx.reshape(n_sub, _SUBLANES, _LANES), axis=0))
        min_ref[...] = jnp.minimum(
            min_ref[...],
            jnp.min(y_mn.reshape(n_sub, _SUBLANES, _LANES), axis=0))

    def _fast_body():
        t = test_ref[...].astype(jnp.float32)
        y = true_ref[...].astype(jnp.float32)
        _accumulate(t - y, y, y)

    def _masked_body():
        t = test_ref[...].astype(jnp.float32)
        y = true_ref[...].astype(jnp.float32)
        n_full_rows = n_elems // _LANES
        rem = n_elems % _LANES
        row_ids = lax.broadcasted_iota(jnp.int32, (block_rows, _LANES), 0)
        g_row = g * block_rows + row_ids       # global row index (int32-safe)
        valid = g_row < n_full_rows
        if rem:
            col_ids = lax.broadcasted_iota(jnp.int32, (block_rows, _LANES), 1)
            valid = valid | ((g_row == n_full_rows) & (col_ids < rem))
        d = jnp.where(valid, t - y, 0.0)
        y_mx = jnp.where(valid, y, -jnp.inf)
        y_mn = jnp.where(valid, y, jnp.inf)
        _accumulate(d, y_mx, y_mn)

    if not needs_mask:
        _fast_body()                           # fully aligned: no mask code
    elif first_mask_block == 0:
        _masked_body()                         # every block has padding
    else:
        @pl.when(g < first_mask_block)
        def _():
            _fast_body()

        @pl.when(g >= first_mask_block)
        def _():
            _masked_body()

    @pl.when(i == pl.num_programs(1) - 1)
    def _finalize():
        # Single cross-lane/sublane reduce per core, stored as partial stats.
        out_ref[0, 0] = jnp.sum(sumsq_ref[...])
        out_ref[0, 1] = jnp.max(max_ref[...])
        out_ref[0, 2] = jnp.min(min_ref[...])


def psnr_loss(image_test, image_true, *, max_block_rows=_MAX_BLOCK_ROWS):
    assert image_test.shape == image_true.shape
    n_elems = int(image_true.size)
    assert n_elems > 0

    test_flat = image_test.reshape(-1)
    true_flat = image_true.reshape(-1)

    # Pad only when the element count is not lane aligned; the padded tail is
    # masked inside the kernel.
    rem = n_elems % _LANES
    if rem:
        pad = _LANES - rem
        test_flat = jnp.pad(test_flat, (0, pad))
        true_flat = jnp.pad(true_flat, (0, pad))

    rows = test_flat.shape[0] // _LANES
    test2d = test_flat.reshape(rows, _LANES)
    true2d = true_flat.reshape(rows, _LANES)

    # Block sizing: big (HBM-roofline) blocks, multiple of the sublane count.
    rows_rounded = ((rows + _SUBLANES - 1) // _SUBLANES) * _SUBLANES
    block_rows = min(max_block_rows, rows_rounded)
    block_rows = max(_SUBLANES, (block_rows // _SUBLANES) * _SUBLANES)

    total_blocks = pl.cdiv(rows, block_rows)
    num_cores = 2 if total_blocks >= 2 else 1      # v7x: one slice per TC
    blocks_per_core = pl.cdiv(total_blocks, num_cores)
    last_block = total_blocks - 1

    block_elems = block_rows * _LANES
    padded_blocks = num_cores * blocks_per_core
    needs_mask = padded_blocks * block_elems > n_elems
    first_mask_block = n_elems // block_elems       # blocks >= this need mask

    def in_index_map(c, i):
        # Clamp so padded (fully out-of-range) blocks never DMA out of bounds;
        # their contents are fully masked via the logical block index.
        return (jnp.minimum(c * blocks_per_core + i, last_block), 0)

    in_spec = pl.BlockSpec((block_rows, _LANES), in_index_map)

    kernel = functools.partial(
        _psnr_stats_kernel,
        n_elems=n_elems,
        block_rows=block_rows,
        blocks_per_core=blocks_per_core,
        needs_mask=needs_mask,
        first_mask_block=first_mask_block)

    stats = pl.pallas_call(
        kernel,
        out_shape=jax.ShapeDtypeStruct((num_cores, 3), jnp.float32),
        grid_spec=pltpu.PrefetchScalarGridSpec(
            num_scalar_prefetch=0,
            grid=(num_cores, blocks_per_core),
            in_specs=[in_spec, in_spec],
            out_specs=pl.BlockSpec((1, 3), lambda c, i: (c, 0),
                                   memory_space=pltpu.SMEM),
            scratch_shapes=[
                pltpu.VMEM((_SUBLANES, _LANES), jnp.float32),  # sum (d^2)
                pltpu.VMEM((_SUBLANES, _LANES), jnp.float32),  # running max
                pltpu.VMEM((_SUBLANES, _LANES), jnp.float32),  # running min
            ],
        ),
        compiler_params=pltpu.CompilerParams(
            dimension_semantics=("parallel", "arbitrary"),
            vmem_limit_bytes=_VMEM_LIMIT_BYTES),
    )(test2d, true2d)

    # Tiny final combine of the per-core partial stats (a few scalar XLA ops).
    sum_sq = jnp.sum(stats[:, 0])
    y_max = jnp.max(stats[:, 1])
    y_min = jnp.min(stats[:, 2])
    mse = sum_sq / jnp.float32(n_elems)
    psnr = 20.0 * jnp.log10(y_max - y_min) - 10.0 * jnp.log10(mse)
    return -psnr


def psnr_loss_ref(image_test, image_true):
    t = image_test.astype(jnp.float32)
    y = image_true.astype(jnp.float32)
    mse = jnp.mean((t - y) ** 2)
    rng = y.max() - y.min()
    return -(20.0 * jnp.log10(rng) - 10.0 * jnp.log10(mse))


if __name__ == "__main__":
    key = jax.random.PRNGKey(0)
    k1, k2, k3, k4 = jax.random.split(key, 4)

    # Case 1: NCHW-shaped inputs, consistent with the PyTorch module's usage.
    shape1 = (2, 4, 16, 16)
    image_true = jax.random.uniform(k1, shape1, dtype=jnp.float32)
    image_test = image_true + 0.05 * jax.random.normal(k2, shape1,
                                                       dtype=jnp.float32)
    loss = psnr_loss(image_test, image_true)
    jax.block_until_ready(loss)
    ref = psnr_loss_ref(image_test, image_true)
    assert jnp.allclose(loss, ref, rtol=1e-5, atol=1e-5), (loss, ref)

    # Case 2: non-lane-aligned size + tiny blocks to exercise the multi-block,
    # two-partial-stats and masked-tail paths at small scale.
    shape2 = (2, 3, 17, 19)
    true2 = jax.random.uniform(k3, shape2, dtype=jnp.float32)
    test2 = true2 + 0.1 * jax.random.normal(k4, shape2, dtype=jnp.float32)
    loss2 = psnr_loss(test2, true2, max_block_rows=8)
    jax.block_until_ready(loss2)
    ref2 = psnr_loss_ref(test2, true2)
    assert jnp.allclose(loss2, ref2, rtol=1e-5, atol=1e-5), (loss2, ref2)

    print("KERNEL_OK")
</pallas_src>

<mosaic_0001>
module attributes {stable_mosaic.version = 11 : i64} {
  func.func @_psnr_stats_kernel(%arg0: i32, %arg1: i32, %arg2: memref<16x128xf32, #tpu.memory_space<vmem>>, %arg3: memref<16x128xf32, #tpu.memory_space<vmem>>, %arg4: memref<1x3xf32, #tpu.memory_space<smem>>, %arg5: memref<8x128xf32, #tpu.memory_space<vmem>>, %arg6: memref<8x128xf32, #tpu.memory_space<vmem>>, %arg7: memref<8x128xf32, #tpu.memory_space<vmem>>) attributes {dimension_semantics = [#tpu.dimension_semantics<parallel>, #tpu.dimension_semantics<arbitrary>], iteration_bounds = array<i64: 1, 1>, scalar_prefetch = 0 : i64, scratch_operands = 3 : i64, tpu.core_type = #tpu.core_type<tc>, window_params = [{transform_indices = @transform_0, window_bounds = array<i64: 16, 128>}, {transform_indices = @transform_1, window_bounds = array<i64: 16, 128>}, {transform_indices = @transform_2, window_bounds = array<i64: 1, 3>}]} {
    %c0_i32 = arith.constant 0 : i32
    %0 = arith.cmpi eq, %arg1, %c0_i32 : i32
    %1 = arith.extui %0 : i1 to i32
    %c0_i32_0 = arith.constant 0 : i32
    %2 = arith.cmpi ne, %1, %c0_i32_0 : i32
    scf.if %2 {
      %cst_20 = arith.constant 0.000000e+00 : f32
      %25 = vector.broadcast %cst_20 : f32 to vector<8x128xf32>
      %c0_21 = arith.constant 0 : index
      %c0_22 = arith.constant 0 : index
      %26 = vector.load %arg5[%c0_21, %c0_22] : memref<8x128xf32, #tpu.memory_space<vmem>>, vector<8x128xf32>
      tpu.vector_store %arg5[%c0_21, %c0_22], %25 {strides = array<i32>} : memref<8x128xf32, #tpu.memory_space<vmem>>, vector<8x128xf32>,
      %cst_23 = arith.constant 0xFF800000 : f32
      %27 = vector.broadcast %cst_23 : f32 to vector<8x128xf32>
      %c0_24 = arith.constant 0 : index
      %c0_25 = arith.constant 0 : index
      %28 = vector.load %arg6[%c0_24, %c0_25] : memref<8x128xf32, #tpu.memory_space<vmem>>, vector<8x128xf32>
      tpu.vector_store %arg6[%c0_24, %c0_25], %27 {strides = array<i32>} : memref<8x128xf32, #tpu.memory_space<vmem>>, vector<8x128xf32>,
      %cst_26 = arith.constant 0x7F800000 : f32
      %29 = vector.broadcast %cst_26 : f32 to vector<8x128xf32>
      %c0_27 = arith.constant 0 : index
      %c0_28 = arith.constant 0 : index
      %30 = vector.load %arg7[%c0_27, %c0_28] : memref<8x128xf32, #tpu.memory_space<vmem>>, vector<8x128xf32>
      tpu.vector_store %arg7[%c0_27, %c0_28], %29 {strides = array<i32>} : memref<8x128xf32, #tpu.memory_space<vmem>>, vector<8x128xf32>,
    } else {
    }
    %c0 = arith.constant 0 : index
    %c0_1 = arith.constant 0 : index
    %3 = vector.load %arg2[%c0, %c0_1] : memref<16x128xf32, #tpu.memory_space<vmem>>, vector<16x128xf32>
    %c0_2 = arith.constant 0 : index
    %c0_3 = arith.constant 0 : index
    %4 = vector.load %arg3[%c0_2, %c0_3] : memref<16x128xf32, #tpu.memory_space<vmem>>, vector<16x128xf32>
    %5 = arith.subf %3, %4 : vector<16x128xf32>
    %6 = arith.mulf %5, %5 : vector<16x128xf32>
    %7 = vector.shape_cast %6 : vector<16x128xf32> to vector<2x8x128xf32>
    %c0_4 = arith.constant 0 : index
    %c0_5 = arith.constant 0 : index
    %8 = vector.load %arg5[%c0_4, %c0_5] : memref<8x128xf32, #tpu.memory_space<vmem>>, vector<8x128xf32>
    %cst = arith.constant dense<0.000000e+00> : vector<8x128xf32>
    %9 = vector.multi_reduction <add>, %7, %cst [0] : vector<2x8x128xf32> to vector<8x128xf32>
    %10 = arith.addf %8, %9 : vector<8x128xf32>
    %c0_6 = arith.constant 0 : index
    %c0_7 = arith.constant 0 : index
    %11 = vector.load %arg5[%c0_6, %c0_7] : memref<8x128xf32, #tpu.memory_space<vmem>>, vector<8x128xf32>
    tpu.vector_store %arg5[%c0_6, %c0_7], %10 {strides = array<i32>} : memref<8x128xf32, #tpu.memory_space<vmem>>, vector<8x128xf32>,
    %c0_8 = arith.constant 0 : index
    %c0_9 = arith.constant 0 : index
    %12 = vector.load %arg6[%c0_8, %c0_9] : memref<8x128xf32, #tpu.memory_space<vmem>>, vector<8x128xf32>
    %13 = vector.shape_cast %4 : vector<16x128xf32> to vector<2x8x128xf32>
    %cst_10 = arith.constant dense<0xFF800000> : vector<8x128xf32>
    %14 = vector.multi_reduction <maximumf>, %13, %cst_10 [0] : vector<2x8x128xf32> to vector<8x128xf32>
    %15 = arith.maximumf %12, %14 : vector<8x128xf32>
    %c0_11 = arith.constant 0 : index
    %c0_12 = arith.constant 0 : index
    %16 = vector.load %arg6[%c0_11, %c0_12] : memref<8x128xf32, #tpu.memory_space<vmem>>, vector<8x128xf32>
    tpu.vector_store %arg6[%c0_11, %c0_12], %15 {strides = array<i32>} : memref<8x128xf32, #tpu.memory_space<vmem>>, vector<8x128xf32>,
    %c0_13 = arith.constant 0 : index
    %c0_14 = arith.constant 0 : index
    %17 = vector.load %arg7[%c0_13, %c0_14] : memref<8x128xf32, #tpu.memory_space<vmem>>, vector<8x128xf32>
    %18 = vector.shape_cast %4 : vector<16x128xf32> to vector<2x8x128xf32>
    %cst_15 = arith.constant dense<0x7F800000> : vector<8x128xf32>
    %19 = vector.multi_reduction <minimumf>, %18, %cst_15 [0] : vector<2x8x128xf32> to vector<8x128xf32>
    %20 = arith.minimumf %17, %19 : vector<8x128xf32>
    %c0_16 = arith.constant 0 : index
    %c0_17 = arith.constant 0 : index
    %21 = vector.load %arg7[%c0_16, %c0_17] : memref<8x128xf32, #tpu.memory_space<vmem>>, vector<8x128xf32>
    tpu.vector_store %arg7[%c0_16, %c0_17], %20 {strides = array<i32>} : memref<8x128xf32, #tpu.memory_space<vmem>>, vector<8x128xf32>,
    %c0_i32_18 = arith.constant 0 : i32
    %22 = arith.cmpi eq, %arg1, %c0_i32_18 : i32
    %23 = arith.extui %22 : i1 to i32
    %c0_i32_19 = arith.constant 0 : i32
    %24 = arith.cmpi ne, %23, %c0_i32_19 : i32
    scf.if %24 {
      %c0_20 = arith.constant 0 : index
      %c0_21 = arith.constant 0 : index
      %25 = vector.load %arg5[%c0_20, %c0_21] : memref<8x128xf32, #tpu.memory_space<vmem>>, vector<8x128xf32>
      %26 = vector.shape_cast %25 : vector<8x128xf32> to vector<1x8x128xf32>
      %cst_22 = arith.constant dense<0.000000e+00> : vector<1xf32>
      %27 = vector.multi_reduction <add>, %26, %cst_22 [1, 2] : vector<1x8x128xf32> to vector<1xf32>
      %28 = vector.shape_cast %27 : vector<1xf32> to vector<1x1x1xf32>
      %29 = vector.extract %28[0, 0, 0] : f32 from vector<1x1x1xf32>
      %c0_23 = arith.constant 0 : index
      %c0_24 = arith.constant 0 : index
      %30 = memref.load %arg4[%c0_23, %c0_24] : memref<1x3xf32, #tpu.memory_space<smem>>
      memref.store %29, %arg4[%c0_23, %c0_24] : memref<1x3xf32, #tpu.memory_space<smem>>
      %c0_25 = arith.constant 0 : index
      %c0_26 = arith.constant 0 : index
      %31 = vector.load %arg6[%c0_25, %c0_26] : memref<8x128xf32, #tpu.memory_space<vmem>>, vector<8x128xf32>
      %32 = vector.shape_cast %31 : vector<8x128xf32> to vector<1x8x128xf32>
      %cst_27 = arith.constant dense<0xFF800000> : vector<1xf32>
      %33 = vector.multi_reduction <maximumf>, %32, %cst_27 [1, 2] : vector<1x8x128xf32> to vector<1xf32>
      %34 = vector.shape_cast %33 : vector<1xf32> to vector<1x1x1xf32>
      %35 = vector.extract %34[0, 0, 0] : f32 from vector<1x1x1xf32>
      %c0_28 = arith.constant 0 : index
      %c1 = arith.constant 1 : index
      %36 = memref.load %arg4[%c0_28, %c1] : memref<1x3xf32, #tpu.memory_space<smem>>
      memref.store %35, %arg4[%c0_28, %c1] : memref<1x3xf32, #tpu.memory_space<smem>>
      %c0_29 = arith.constant 0 : index
      %c0_30 = arith.constant 0 : index
      %37 = vector.load %arg7[%c0_29, %c0_30] : memref<8x128xf32, #tpu.memory_space<vmem>>, vector<8x128xf32>
      %38 = vector.shape_cast %37 : vector<8x128xf32> to vector<1x8x128xf32>
      %cst_31 = arith.constant dense<0x7F800000> : vector<1xf32>
      %39 = vector.multi_reduction <minimumf>, %38, %cst_31 [1, 2] : vector<1x8x128xf32> to vector<1xf32>
      %40 = vector.shape_cast %39 : vector<1xf32> to vector<1x1x1xf32>
      %41 = vector.extract %40[0, 0, 0] : f32 from vector<1x1x1xf32>
      %c0_32 = arith.constant 0 : index
      %c2 = arith.constant 2 : index
      %42 = memref.load %arg4[%c0_32, %c2] : memref<1x3xf32, #tpu.memory_space<smem>>
      memref.store %41, %arg4[%c0_32, %c2] : memref<1x3xf32, #tpu.memory_space<smem>>
    } else {
    }
    return
  }
  func.func @transform_0(%arg0: i32, %arg1: i32) -> (i32, i32) {
    %c1_i32 = arith.constant 1 : i32
    %0 = arith.muli %arg0, %c1_i32 : i32
    %1 = arith.addi %0, %arg1 : i32
    %c0_i32 = arith.constant 0 : i32
    %2 = arith.minsi %1, %c0_i32 : i32
    %c0_i32_0 = arith.constant 0 : i32
    %c0_i32_1 = arith.constant 0 : i32
    return %2, %c0_i32_0 : i32, i32
  }
  func.func @transform_1(%arg0: i32, %arg1: i32) -> (i32, i32) {
    %c1_i32 = arith.constant 1 : i32
    %0 = arith.muli %arg0, %c1_i32 : i32
    %1 = arith.addi %0, %arg1 : i32
    %c0_i32 = arith.constant 0 : i32
    %2 = arith.minsi %1, %c0_i32 : i32
    %c0_i32_0 = arith.constant 0 : i32
    %c0_i32_1 = arith.constant 0 : i32
    return %2, %c0_i32_0 : i32, i32
  }
  func.func @transform_2(%arg0: i32, %arg1: i32) -> (i32, i32) {
    %c0_i32 = arith.constant 0 : i32
    %c0_i32_0 = arith.constant 0 : i32
    return %arg0, %c0_i32 : i32, i32
  }
}

</mosaic_0001>

<llo_original>
// kernel: tpu_custom_call.1
$region0: #{tpu_custom_call.1}
  #allocation0 [shape = 'u32[]', space=smem, size = 0x4, offset = 0x4, fixed_abs, tag = 'smem constant byte address 0x4 - core index']
  #allocation1 [shape = 'u32[72,128]{1,0:T(1,128)}', space=vmem, size = 0x9000, scoped, tag = 'internal scratch']
  #allocation2 [shape = 'f32[8,128]{1,0:T(8,128)}', space=vmem, size = 0x1000, scoped, tag = 'scratch operand']
  #allocation3 [shape = 'f32[8,128]{1,0:T(8,128)}', space=vmem, size = 0x1000, scoped, tag = 'scratch operand']
  #allocation4 [shape = 'f32[8,128]{1,0:T(8,128)}', space=vmem, size = 0x1000, scoped, tag = 'scratch operand']
  %s0 = inlined_call_operand.hbm [shape: f32[16,128], index: 0, kind: input, shape index: {}]
  %s1 = inlined_call_operand.hbm [shape: f32[16,128], index: 1, kind: input, shape index: {}]
  %s2 = inlined_call_operand.hbm [shape: f32[1,3], index: 2, kind: output, shape index: {}]
  %s3 = sld [smem:[#allocation0]]
  $region34: #{tpu_custom_call.1} parent=0
    _
  %s5 = ssub.s32 1, %s3
  %s6 = scalar_select 0, %s5, %s3
  $region1: #{tpu_custom_call.1} parent=0
    #allocation5 [shape = 'u8[8192]{0}', space=vmem, size = 0x2000, scoped, tag = 'input window, operand 0, single buffered']
    #allocation6 [shape = 's32[1]{0}', space=sflag, size = 0x4, scoped, tag = 'scoped memory for tpu_custom_call.1']
    #allocation7 [shape = 's32[1]{0}', space=sflag, size = 0x4, scoped, tag = 'scoped memory for tpu_custom_call.1']
    #allocation8 [shape = 'u8[8192]{0}', space=vmem, size = 0x2000, scoped, tag = 'input window, operand 1, single buffered']
    #allocation9 [shape = 's32[1]{0}', space=sflag, size = 0x4, scoped, tag = 'scoped memory for tpu_custom_call.1']
    #allocation10 [shape = 'u8[512]{0}', space=smem, size = 0x200, scoped, tag = 'output window, operand 0, single buffered']
    %7 = vsyncpa [#allocation6], 0
    %8 = vsyncpa [#allocation9], 0
    %9 = vsyncpa [#allocation7], 0
    // Predicated region
    $region2: #{tpu_custom_call.1} parent=1 // pred_check
      _
    $region3: #{tpu_custom_call.1} parent=1 // pred_check_branch
      %11 = sbr.rel (0) target = $region5
    $region4: #{tpu_custom_call.1} parent=1 // pred_region
      %s12 = sadd.s32 0, 0
      %p13 = scmp.lt.s32.totalorder %s12, 0
      %s14 = scalar_select %p13, %s12, 0
      %s15 = smul.u32 2, %s14
      %17 = vsyncadd [#allocation6], 0
      %s18 = smul.addr %s15, 8
      %s19 = scalar_lea.hbm %s0, %s18
      %s20 = sshll.u32 %s19, 4
      %s21 = int_to_ptr.hbm [resolvable:$true] %s20
      %s22 = sshll.u32 [#allocation5], 4
      %s23 = int_to_ptr.vmem [resolvable:$true] %s22
      %28 = dma.hbm_to_vmem [thread:$0]  %s21, 256, %s23, [#allocation6], 128, 128, 8
    $region5: #{tpu_custom_call.1} parent=1 // pred_fallthru
      _
    // Predicated region
    $region6: #{tpu_custom_call.1} parent=1 // pred_check
      _
    $region7: #{tpu_custom_call.1} parent=1 // pred_check_branch
      %30 = sbr.rel (0) target = $region9
    $region8: #{tpu_custom_call.1} parent=1 // pred_region
      %s31 = sadd.s32 0, 0
      %p32 = scmp.lt.s32.totalorder %s31, 0
      %s33 = scalar_select %p32, %s31, 0
      %s34 = smul.u32 2, %s33
      %36 = vsyncadd [#allocation9], 0
      %s37 = smul.addr %s34, 8
      %s38 = scalar_lea.hbm %s1, %s37
      %s39 = sshll.u32 %s38, 4
      %s40 = int_to_ptr.hbm [resolvable:$true] %s39
      %s41 = sshll.u32 [#allocation8], 4
      %s42 = int_to_ptr.vmem [resolvable:$true] %s41
      %47 = dma.hbm_to_vmem [thread:$0]  %s40, 256, %s42, [#allocation9], 128, 128, 8
    $region9: #{tpu_custom_call.1} parent=1 // pred_fallthru
      _
    // Predicated region
    $region10: #{tpu_custom_call.1} parent=1 // pred_check
      _
    $region11: #{tpu_custom_call.1} parent=1 // pred_check_branch
      %49 = sbr.rel (0) target = $region13
    $region12: #{tpu_custom_call.1} parent=1 // pred_region
      %51 = dma.done [#allocation6], 256
    $region13: #{tpu_custom_call.1} parent=1 // pred_fallthru
      _
    // Predicated region
    $region14: #{tpu_custom_call.1} parent=1 // pred_check
      _
    $region15: #{tpu_custom_call.1} parent=1 // pred_check_branch
      %53 = sbr.rel (0) target = $region17
    $region16: #{tpu_custom_call.1} parent=1 // pred_region
      %55 = dma.done [#allocation9], 256
    $region17: #{tpu_custom_call.1} parent=1 // pred_fallthru
      _
    %s56 = sadd.s32 0, 0
    %p57 = scmp.lt.s32.totalorder %s56, 0
    %s58 = scalar_select %p57, %s56, 0
    %s59 = smul.u32 2, %s58
    %s60 = sadd.s32 0, 0
    %p61 = scmp.lt.s32.totalorder %s60, 0
    %s62 = scalar_select %p61, %s60, 0
    %s63 = smul.u32 2, %s62
    %p64 = scmp.eq.s32.totalorder 0, 0
    // Predicated region
    $region18: #{tpu_custom_call.1} parent=1 // pred_check
      %p65 = pneg %p64
    $region19: #{tpu_custom_call.1} parent=1 // pred_check_branch
      %67 = sbr.rel (%p65) target = $region21
    $region20: #{tpu_custom_call.1} parent=1 // pred_region
      %68 = vst [vmem:[#allocation2] sm:$0xff] 0.0
      %69 = vst [vmem:[#allocation3] sm:$0xff] -inf
      %70 = vst [vmem:[#allocation4] sm:$0xff] inf
    $region21: #{tpu_custom_call.1} parent=1 // pred_fallthru
      _
    %v71 = vld [vmem:[#allocation5] sm:$0xff]
    %v72 = vld [vmem:[#allocation5 + $0x8] sm:$0xff]
    %v73 = vld [vmem:[#allocation8] sm:$0xff]
    %v74 = vld [vmem:[#allocation8 + $0x8] sm:$0xff]
    %v75 = vsub.f32 %v71, %v73
    %v76 = vsub.f32 %v72, %v74
    %v77 = vmul.f32 %v75, %v75
    %v78 = vmul.f32 %v76, %v76
    %v79 = vld [vmem:[#allocation2] sm:$0xff]
    %v80 = vadd.f32 %v77, %v78
    %v81 = vadd.f32 %v79, %v80
    %82 = vst [vmem:[#allocation2] sm:$0xff] %v81
    %v83 = vld [vmem:[#allocation3] sm:$0xff]
    %v84 = vmax.f32 %v73, %v74
    %v85 = vmax.f32 %v83, %v84
    %86 = vst [vmem:[#allocation3] sm:$0xff] %v85
    %v87 = vld [vmem:[#allocation4] sm:$0xff]
    %v88 = vmin.f32 %v73, %v74
    %v89 = vmin.f32 %v87, %v88
    %90 = vst [vmem:[#allocation4] sm:$0xff] %v89
    // Predicated region
    $region22: #{tpu_custom_call.1} parent=1 // pred_check
      %p91 = pneg %p64
    $region23: #{tpu_custom_call.1} parent=1 // pred_check_branch
      %93 = sbr.rel (%p91) target = $region25
    $region24: #{tpu_custom_call.1} parent=1 // pred_region
      %v94 = vld [vmem:[#allocation2] sm:$0xff]
      %95 = vadd.xlane.f32.xlu0 %v94
      %v96 = vpop.xlane.xlu0 %95
      %v97 = vrot.slane %v96, 4
      %v98 = vadd.f32 %v96, %v97
      %v99 = vrot.slane %v98, 2
      %v100 = vadd.f32 %v98, %v99
      %v101 = vrot.slane %v100, 1
      %v102 = vadd.f32 %v100, %v101
      %s103 = vtos %v102
      %s104 = scalar_lea.smem [#allocation10], 0
      %105 = sst [smem:[%s104]] %s103
      %v106 = vld [vmem:[#allocation3] sm:$0xff]
      %107 = vmax.xlane.f32.xlu0 %v106
      %v108 = vpop.xlane.xlu0 %107
      %v109 = vrot.slane %v108, 4
      %v110 = vmax.f32 %v108, %v109
      %v111 = vrot.slane %v110, 2
      %v112 = vmax.f32 %v110, %v111
      %v113 = vrot.slane %v112, 1
      %v114 = vmax.f32 %v112, %v113
      %s115 = vtos %v114
      %s116 = scalar_lea.smem [#allocation10], 1
      %117 = sst [smem:[%s116]] %s115
      %v118 = vld [vmem:[#allocation4] sm:$0xff]
      %119 = vmin.xlane.f32.xlu0 %v118
      %v120 = vpop.xlane.xlu0 %119
      %v121 = vrot.slane %v120, 4
      %v122 = vmin.f32 %v120, %v121
      %v123 = vrot.slane %v122, 2
      %v124 = vmin.f32 %v122, %v123
      %v125 = vrot.slane %v124, 1
      %v126 = vmin.f32 %v124, %v125
      %s127 = vtos %v126
      %s128 = scalar_lea.smem [#allocation10], 2
      %129 = sst [smem:[%s128]] %s127
    $region25: #{tpu_custom_call.1} parent=1 // pred_fallthru
      _
    // Predicated region
    $region26: #{tpu_custom_call.1} parent=1 // pred_check
      _
    $region27: #{tpu_custom_call.1} parent=1 // pred_check_branch
      %131 = sbr.rel (0) target = $region29
    $region28: #{tpu_custom_call.1} parent=1 // pred_region
      %133 = vsyncadd [#allocation7], 0
      %s135 = sshll.u32 %s2, 4
      %s136 = int_to_ptr.hbm [resolvable:$true] %s135
      %138 = dma.smem_to_hbm [#allocation10], 16, %s136, [#allocation7]
    $region29: #{tpu_custom_call.1} parent=1 // pred_fallthru
      _
    // Predicated region
    $region30: #{tpu_custom_call.1} parent=1 // pred_check
      _
    $region31: #{tpu_custom_call.1} parent=1 // pred_check_branch
      %140 = sbr.rel (0) target = $region33
    $region32: #{tpu_custom_call.1} parent=1 // pred_region
      %142 = dma.done [#allocation7], 16
    $region33: #{tpu_custom_call.1} parent=1 // pred_fallthru
      _
    %143 = sfence
    %144 = vsyncpa [#allocation6], 1
    %145 = vsyncpa [#allocation9], 1
    %146 = vsyncpa [#allocation7], 1

</llo_original>
